<compile_context>
chip_gen: v7x
topology: tpu7x:2x2x1
jax: 0.10.0
libtpu: 0.0.40
codegen_flags: <defaults>
</compile_context>

<pallas_src>
import math
import functools

import jax
import jax.numpy as jnp
from jax.experimental import pallas as pl
from jax.experimental.pallas import tpu as pltpu


def _round_up(x, m):
    return ((x + m - 1) // m) * m


def _relu(v):
    return jnp.maximum(v, 0.0)


def _vmem_capacity_bytes():
    """Per-core VMEM capacity; conservative fallback if the query is unavailable."""
    try:
        return int(pltpu.get_tpu_info().vmem_capacity_bytes)
    except Exception:
        return 64 << 20  # v7x per-TC figure: safe everywhere


def _mlp_fused_kernel(*refs, n_hidden, activation):
    """refs = x_ref, (w0, b0, ..., w_{H-1}, b_{H-1}), w_last, b_last, o_ref.

    x_ref   : (TB, Din_pad)            f32
    w_l     : (Din_pad_l, Hid_pad_l)   bf16  (pre-transposed: y = x @ w)
    b_l     : (1, Hid_pad_l)           f32
    w_last  : (1, Hid_pad)             f32   (single output row, padded lanes = 0)
    b_last  : (1, 1)                   f32
    o_ref   : (TB, 1)                  f32
    """
    x_ref = refs[0]
    wb = refs[1:1 + 2 * n_hidden]
    w_last_ref = refs[1 + 2 * n_hidden]
    b_last_ref = refs[2 + 2 * n_hidden]
    o_ref = refs[3 + 2 * n_hidden]

    cur = x_ref[...]                                     # f32 (TB, Din_pad)
    for l in range(n_hidden):
        w_ref = wb[2 * l]
        b_ref = wb[2 * l + 1]
        # bf16 x bf16 -> f32 accumulate: native MXU rate on v5e/v6e/v7x.
        y = jax.lax.dot_general(
            cur.astype(jnp.bfloat16), w_ref[...],
            dimension_numbers=(((1,), (0,)), ((), ())),
            preferred_element_type=jnp.float32)
        # Bias + activation in f32 (VPU-safe on v5e); value stays in registers,
        # no VMEM store/reload between layers.
        cur = activation(y + b_ref[...])

    # Final Dout=1 layer: VPU multiply + lane reduction (XLU) instead of a
    # (Hid_pad x 128) MXU matmul with 127 wasted columns.  Padded lanes of
    # w_last are zero, so any nonzero padded activations are killed exactly.
    y = jnp.sum(cur * w_last_ref[...], axis=-1, keepdims=True) + b_last_ref[...]
    o_ref[...] = y.astype(o_ref.dtype)


def prepare_mlp_params(params):
    """Pad PyTorch-layout (Dout, Din) weights.

    Hidden layers -> transposed, zero-padded bf16 (Din_pad, Dout_pad) with f32
    (1, Dout_pad) biases.  Final (width -> 1) layer -> a single f32 row
    (1, Din_pad) plus a (1, 1) bias for the VPU reduction path.  Zero padding is
    exact for any activation: padded lanes are annihilated by the next layer's
    zeroed weight rows / the zeroed last-layer columns.
    """
    n = len(params)
    prepped = []
    for idx, (w, b) in enumerate(params):
        w = jnp.asarray(w, jnp.float32)
        b = jnp.asarray(b, jnp.float32)
        dout, din = w.shape
        din_p = _round_up(din, 128)
        if idx < n - 1:
            dout_p = _round_up(dout, 128)
            wt = jnp.zeros((din_p, dout_p), jnp.bfloat16).at[:din, :dout].set(
                w.T.astype(jnp.bfloat16))
            bp = jnp.zeros((1, dout_p), jnp.float32).at[0, :dout].set(b)
        else:
            assert dout == 1, "MLP spec: final layer maps layer_width -> 1"
            wt = jnp.zeros((1, din_p), jnp.float32).at[0, :din].set(w[0])
            bp = b.reshape(1, 1)
        prepped.append((wt, bp))
    return prepped


def mlp_forward(x, params, *, activation=_relu, batch_tile=None):
    """Fused MLP forward. x: (B, input_dimension); params: PyTorch-layout list of
    (w, b) with w of shape (Dout, Din). Returns (B, 1) float32."""
    n_layers = len(params)
    n_hidden = n_layers - 1
    B, Din = x.shape
    prepped = prepare_mlp_params(params)

    din_p = prepped[0][0].shape[0]                      # padded input width
    hid_p = (max(w.shape[1] for (w, _) in prepped[:-1])
             if n_hidden > 0 else din_p)                # widest padded hidden layer

    vmem_cap = _vmem_capacity_bytes()
    # ~7/8 of physical per-core VMEM: ~112 MiB on v5e/v6e, ~56 MiB on v7x.
    vmem_ceiling = max(min((vmem_cap * 7) // 8, 112 << 20), 32 << 20)

    if batch_tile is None:
        batch_tile = 512 if vmem_cap >= (96 << 20) else 256
    batch_tile = max(8, _round_up(batch_tile, 8))

    # Keep >= 2 grid steps when the batch allows it so both v7x TensorCores get
    # work under dimension_semantics=("parallel",); TB multiple of 8 (f32 sublane).
    tb = min(_round_up(pl.cdiv(B, 2), 8), batch_tile)
    b_pad = _round_up(B, tb)
    grid = (b_pad // tb,)

    x_p = jnp.zeros((b_pad, din_p), jnp.float32).at[:B, :Din].set(
        jnp.asarray(x, jnp.float32))

    flat_inputs = [x_p]
    for (wt, bp) in prepped:
        flat_inputs.extend([wt, bp])

    # VMEM budget: resident weights counted once (single-buffered), pipelined
    # x/out tiles x2, activation temporaries, plus headroom for compiler scratch.
    weight_bytes = sum(w.size * w.dtype.itemsize + b.size * b.dtype.itemsize
                       for (w, b) in prepped)
    x_tile_bytes = 2 * tb * din_p * 4                    # double-buffered input tile
    out_tile_bytes = 2 * tb * 128 * 4                    # double-buffered output tile (lane-padded)
    act_bytes = 2 * tb * hid_p * 4                       # register/VMEM temporaries
    vmem_bytes = weight_bytes + x_tile_bytes + out_tile_bytes + act_bytes + (4 << 20)
    vmem_bytes = int(min(max(vmem_bytes, 32 << 20), vmem_ceiling))
    # TODO(synk): if weight_bytes alone exceeds vmem_ceiling, stream weights via
    # an extra "arbitrary" grid axis (per-layer / per-K blocks) instead of
    # keeping them all VMEM-resident.

    def _resident_spec(shape, single_buffer):
        if single_buffer:
            # Constant index_map -> never re-fetched; one buffer halves footprint.
            return pl.BlockSpec(shape, lambda i: (0, 0),
                                pipeline_mode=pl.Buffered(1))
        return pl.BlockSpec(shape, lambda i: (0, 0))

    def _build(single_buffer_weights):
        in_specs = [pl.BlockSpec((tb, din_p), lambda i: (i, 0))]
        for (wt, bp) in prepped[:-1]:
            dp, op_ = wt.shape
            in_specs.append(_resident_spec((dp, op_), single_buffer_weights))
            in_specs.append(_resident_spec((1, op_), single_buffer_weights))
        w_last, b_last = prepped[-1]
        in_specs.append(_resident_spec(w_last.shape, single_buffer_weights))
        in_specs.append(_resident_spec(b_last.shape, single_buffer_weights))
        out_specs = pl.BlockSpec((tb, 1), lambda i: (i, 0))

        return pl.pallas_call(
            functools.partial(_mlp_fused_kernel, n_hidden=n_hidden,
                              activation=activation),
            out_shape=jax.ShapeDtypeStruct((b_pad, 1), jnp.float32),
            grid_spec=pltpu.PrefetchScalarGridSpec(
                num_scalar_prefetch=0,
                grid=grid,
                in_specs=in_specs,
                out_specs=out_specs),
            compiler_params=pltpu.CompilerParams(
                dimension_semantics=("parallel",),
                vmem_limit_bytes=vmem_bytes),
        )

    try:
        out = _build(single_buffer_weights=True)(*flat_inputs)
    except Exception:
        # pipeline_mode / Buffered(1) unsupported on this JAX build: fall back to
        # default double-buffering (correct; just 2x the resident-weight VMEM).
        out = _build(single_buffer_weights=False)(*flat_inputs)

    return out[:B, :]


def init_mlp_params(key, input_dimension, n_layers, layer_width,
                    small_features=False, epsilon=None):
    """Deterministic init mirroring the PyTorch module's layer shapes/init."""
    dims = [(input_dimension, layer_width)]
    for _ in range(n_layers - 2):
        dims.append((layer_width, layer_width))
    dims.append((layer_width, 1))

    params = []
    for (din, dout) in dims:
        key, kw, kb = jax.random.split(key, 3)
        if small_features:
            w = epsilon * jax.random.normal(kw, (dout, din), jnp.float32)
            b = epsilon * jax.random.normal(kb, (dout,), jnp.float32)
        else:
            # PyTorch nn.Linear default: U(-1/sqrt(fan_in), 1/sqrt(fan_in))
            bound = 1.0 / math.sqrt(din)
            w = jax.random.uniform(kw, (dout, din), jnp.float32, -bound, bound)
            b = jax.random.uniform(kb, (dout,), jnp.float32, -bound, bound)
        params.append((w, b))

    if small_features:
        # final layer zero-initialized (matches .fill_(0.0))
        w_last, b_last = params[-1]
        params[-1] = (jnp.zeros_like(w_last), jnp.zeros_like(b_last))
    return params


def mlp_forward_ref_f32(x, params):
    """Pure-f32 reference (module semantics, ReLU activation)."""
    h = x
    for (w, b) in params[:-1]:
        h = jnp.maximum(h @ w.T + b, 0.0)
    w, b = params[-1]
    return h @ w.T + b


def mlp_forward_ref_bf16(x, params):
    """Mirrors the kernel's math: bf16 matmul operands, f32 accumulate/epilogue."""
    h = x
    for (w, b) in params[:-1]:
        h = jnp.dot(h.astype(jnp.bfloat16), w.T.astype(jnp.bfloat16),
                    preferred_element_type=jnp.float32)
        h = jnp.maximum(h + b, 0.0)
    w, b = params[-1]
    return h @ w.T + b


if __name__ == "__main__":
    key = jax.random.PRNGKey(0)
    k_x, k_p = jax.random.split(key)

    batch = 8
    input_dimension = 16
    n_layers = 3
    layer_width = 32

    x = jax.random.normal(k_x, (batch, input_dimension), jnp.float32)
    params = init_mlp_params(k_p, input_dimension, n_layers, layer_width)

    out = mlp_forward(x, params)
    out = jax.block_until_ready(out)

    assert out.shape == (batch, 1)
    # Tight check against a reference that mimics the kernel's bf16-weight math.
    ref_bf16 = mlp_forward_ref_bf16(x, params)
    assert jnp.allclose(out, ref_bf16, atol=1e-5, rtol=1e-4)
    # Looser check against the full-f32 module semantics (bf16 weight rounding).
    ref_f32 = mlp_forward_ref_f32(x, params)
    assert jnp.allclose(out, ref_f32, atol=3e-2, rtol=3e-2)

    print("KERNEL_OK")
</pallas_src>

<mosaic_0001>
module attributes {stable_mosaic.version = 11 : i64} {
  func.func @_mlp_fused_kernel(%arg0: i32, %arg1: memref<8x128xf32, #tpu.memory_space<vmem>>, %arg2: memref<128x128xbf16, #tpu.memory_space<vmem>>, %arg3: memref<1x128xf32, #tpu.memory_space<vmem>>, %arg4: memref<128x128xbf16, #tpu.memory_space<vmem>>, %arg5: memref<1x128xf32, #tpu.memory_space<vmem>>, %arg6: memref<1x128xf32, #tpu.memory_space<vmem>>, %arg7: memref<1x1xf32, #tpu.memory_space<vmem>>, %arg8: memref<8x1xf32, #tpu.memory_space<vmem>>) attributes {dimension_semantics = [#tpu.dimension_semantics<parallel>], iteration_bounds = array<i64: 1>, scalar_prefetch = 0 : i64, scratch_operands = 0 : i64, tpu.core_type = #tpu.core_type<tc>, window_params = [{transform_indices = @transform_0, window_bounds = array<i64: 8, 128>}, {pipeline_mode = #tpu.pipeline_mode<synchronous>, transform_indices = @transform_1, window_bounds = array<i64: 128, 128>}, {pipeline_mode = #tpu.pipeline_mode<synchronous>, transform_indices = @transform_2, window_bounds = array<i64: 1, 128>}, {pipeline_mode = #tpu.pipeline_mode<synchronous>, transform_indices = @transform_3, window_bounds = array<i64: 128, 128>}, {pipeline_mode = #tpu.pipeline_mode<synchronous>, transform_indices = @transform_4, window_bounds = array<i64: 1, 128>}, {pipeline_mode = #tpu.pipeline_mode<synchronous>, transform_indices = @transform_5, window_bounds = array<i64: 1, 128>}, {pipeline_mode = #tpu.pipeline_mode<synchronous>, transform_indices = @transform_6, window_bounds = array<i64: 1, 1>}, {transform_indices = @transform_7, window_bounds = array<i64: 8, 1>}]} {
    %c0 = arith.constant 0 : index
    %c0_0 = arith.constant 0 : index
    %0 = vector.load %arg1[%c0, %c0_0] : memref<8x128xf32, #tpu.memory_space<vmem>>, vector<8x128xf32>
    %1 = arith.truncf %0 : vector<8x128xf32> to vector<8x128xbf16>
    %c0_1 = arith.constant 0 : index
    %c0_2 = arith.constant 0 : index
    %2 = vector.load %arg2[%c0_1, %c0_2] : memref<128x128xbf16, #tpu.memory_space<vmem>>, vector<128x128xbf16>
    %cst = arith.constant dense<0.000000e+00> : vector<8x128xf32>
    %3 = tpu.matmul %1, %2, %cst {dimension_numbers = #tpu.dot_dimension_numbers<[1], [0], [0], [1], [0, 0, 1, 1], [], []>} : vector<8x128xbf16>, vector<128x128xbf16>, vector<8x128xf32> -> vector<8x128xf32>
    %c0_3 = arith.constant 0 : index
    %c0_4 = arith.constant 0 : index
    %4 = vector.load %arg3[%c0_3, %c0_4] : memref<1x128xf32, #tpu.memory_space<vmem>>, vector<1x128xf32>
    %5 = vector.broadcast %4 : vector<1x128xf32> to vector<8x128xf32>
    %6 = arith.addf %3, %5 : vector<8x128xf32>
    %cst_5 = arith.constant 0.000000e+00 : f32
    %7 = vector.broadcast %cst_5 : f32 to vector<8x128xf32>
    %8 = arith.maximumf %6, %7 : vector<8x128xf32>
    %9 = arith.truncf %8 : vector<8x128xf32> to vector<8x128xbf16>
    %c0_6 = arith.constant 0 : index
    %c0_7 = arith.constant 0 : index
    %10 = vector.load %arg4[%c0_6, %c0_7] : memref<128x128xbf16, #tpu.memory_space<vmem>>, vector<128x128xbf16>
    %cst_8 = arith.constant dense<0.000000e+00> : vector<8x128xf32>
    %11 = tpu.matmul %9, %10, %cst_8 {dimension_numbers = #tpu.dot_dimension_numbers<[1], [0], [0], [1], [0, 0, 1, 1], [], []>} : vector<8x128xbf16>, vector<128x128xbf16>, vector<8x128xf32> -> vector<8x128xf32>
    %c0_9 = arith.constant 0 : index
    %c0_10 = arith.constant 0 : index
    %12 = vector.load %arg5[%c0_9, %c0_10] : memref<1x128xf32, #tpu.memory_space<vmem>>, vector<1x128xf32>
    %13 = vector.broadcast %12 : vector<1x128xf32> to vector<8x128xf32>
    %14 = arith.addf %11, %13 : vector<8x128xf32>
    %cst_11 = arith.constant 0.000000e+00 : f32
    %15 = vector.broadcast %cst_11 : f32 to vector<8x128xf32>
    %16 = arith.maximumf %14, %15 : vector<8x128xf32>
    %c0_12 = arith.constant 0 : index
    %c0_13 = arith.constant 0 : index
    %17 = vector.load %arg6[%c0_12, %c0_13] : memref<1x128xf32, #tpu.memory_space<vmem>>, vector<1x128xf32>
    %18 = vector.broadcast %17 : vector<1x128xf32> to vector<8x128xf32>
    %19 = arith.mulf %16, %18 : vector<8x128xf32>
    %cst_14 = arith.constant dense<0.000000e+00> : vector<8xf32>
    %20 = vector.multi_reduction <add>, %19, %cst_14 [1] : vector<8x128xf32> to vector<8xf32>
    %21 = vector.shape_cast %20 : vector<8xf32> to vector<8x1xf32>
    %c0_15 = arith.constant 0 : index
    %c0_16 = arith.constant 0 : index
    %22 = vector.load %arg7[%c0_15, %c0_16] : memref<1x1xf32, #tpu.memory_space<vmem>>, vector<1x1xf32>
    %23 = vector.broadcast %22 : vector<1x1xf32> to vector<8x1xf32>
    %24 = arith.addf %21, %23 : vector<8x1xf32>
    %c0_17 = arith.constant 0 : index
    %c0_18 = arith.constant 0 : index
    %25 = vector.load %arg8[%c0_17, %c0_18] : memref<8x1xf32, #tpu.memory_space<vmem>>, vector<8x1xf32>
    tpu.vector_store %arg8[%c0_17, %c0_18], %24 {strides = array<i32>} : memref<8x1xf32, #tpu.memory_space<vmem>>, vector<8x1xf32>,
    return
  }
  func.func @transform_0(%arg0: i32) -> (i32, i32) {
    %c0_i32 = arith.constant 0 : i32
    %c0_i32_0 = arith.constant 0 : i32
    return %arg0, %c0_i32 : i32, i32
  }
  func.func @transform_1(%arg0: i32) -> (i32, i32) {
    %c0_i32 = arith.constant 0 : i32
    %c0_i32_0 = arith.constant 0 : i32
    %c0_i32_1 = arith.constant 0 : i32
    return %c0_i32, %c0_i32_0 : i32, i32
  }
  func.func @transform_2(%arg0: i32) -> (i32, i32) {
    %c0_i32 = arith.constant 0 : i32
    %c0_i32_0 = arith.constant 0 : i32
    %c0_i32_1 = arith.constant 0 : i32
    return %c0_i32, %c0_i32_0 : i32, i32
  }
  func.func @transform_3(%arg0: i32) -> (i32, i32) {
    %c0_i32 = arith.constant 0 : i32
    %c0_i32_0 = arith.constant 0 : i32
    %c0_i32_1 = arith.constant 0 : i32
    return %c0_i32, %c0_i32_0 : i32, i32
  }
  func.func @transform_4(%arg0: i32) -> (i32, i32) {
    %c0_i32 = arith.constant 0 : i32
    %c0_i32_0 = arith.constant 0 : i32
    %c0_i32_1 = arith.constant 0 : i32
    return %c0_i32, %c0_i32_0 : i32, i32
  }
  func.func @transform_5(%arg0: i32) -> (i32, i32) {
    %c0_i32 = arith.constant 0 : i32
    %c0_i32_0 = arith.constant 0 : i32
    %c0_i32_1 = arith.constant 0 : i32
    return %c0_i32, %c0_i32_0 : i32, i32
  }
  func.func @transform_6(%arg0: i32) -> (i32, i32) {
    %c0_i32 = arith.constant 0 : i32
    %c0_i32_0 = arith.constant 0 : i32
    %c0_i32_1 = arith.constant 0 : i32
    return %c0_i32, %c0_i32_0 : i32, i32
  }
  func.func @transform_7(%arg0: i32) -> (i32, i32) {
    %c0_i32 = arith.constant 0 : i32
    %c0_i32_0 = arith.constant 0 : i32
    return %arg0, %c0_i32 : i32, i32
  }
}

module attributes {stable_mosaic.version = 11 : i64} {
  func.func @_mlp_fused_kernel(%arg0: i32, %arg1: memref<8x128xf32, #tpu.memory_space<vmem>>, %arg2: memref<128x128xbf16, #tpu.memory_space<vmem>>, %arg3: memref<1x128xf32, #tpu.memory_space<vmem>>, %arg4: memref<128x128xbf16, #tpu.memory_space<vmem>>, %arg5: memref<1x128xf32, #tpu.memory_space<vmem>>, %arg6: memref<1x128xf32, #tpu.memory_space<vmem>>, %arg7: memref<1x1xf32, #tpu.memory_space<vmem>>, %arg8: memref<8x1xf32, #tpu.memory_space<vmem>>) attributes {dimension_semantics = [#tpu.dimension_semantics<parallel>], iteration_bounds = array<i64: 1>, scalar_prefetch = 0 : i64, scratch_operands = 0 : i64, tpu.core_type = #tpu.core_type<tc>, window_params = [{transform_indices = @transform_0, window_bounds = array<i64: 8, 128>}, {pipeline_mode = #tpu.pipeline_mode<synchronous>, transform_indices = @transform_1, window_bounds = array<i64: 128, 128>}, {pipeline_mode = #tpu.pipeline_mode<synchronous>, transform_indices = @transform_2, window_bounds = array<i64: 1, 128>}, {pipeline_mode = #tpu.pipeline_mode<synchronous>, transform_indices = @transform_3, window_bounds = array<i64: 128, 128>}, {pipeline_mode = #tpu.pipeline_mode<synchronous>, transform_indices = @transform_4, window_bounds = array<i64: 1, 128>}, {pipeline_mode = #tpu.pipeline_mode<synchronous>, transform_indices = @transform_5, window_bounds = array<i64: 1, 128>}, {pipeline_mode = #tpu.pipeline_mode<synchronous>, transform_indices = @transform_6, window_bounds = array<i64: 1, 1>}, {transform_indices = @transform_7, window_bounds = array<i64: 8, 1>}]} {
    %c0 = arith.constant 0 : index
    %c0_0 = arith.constant 0 : index
    %0 = vector.load %arg1[%c0, %c0_0] : memref<8x128xf32, #tpu.memory_space<vmem>>, vector<8x128xf32>
    %1 = arith.truncf %0 : vector<8x128xf32> to vector<8x128xbf16>
    %c0_1 = arith.constant 0 : index
    %c0_2 = arith.constant 0 : index
    %2 = vector.load %arg2[%c0_1, %c0_2] : memref<128x128xbf16, #tpu.memory_space<vmem>>, vector<128x128xbf16>
    %cst = arith.constant dense<0.000000e+00> : vector<8x128xf32>
    %3 = tpu.matmul %1, %2, %cst {dimension_numbers = #tpu.dot_dimension_numbers<[1], [0], [0], [1], [0, 0, 1, 1], [], []>} : vector<8x128xbf16>, vector<128x128xbf16>, vector<8x128xf32> -> vector<8x128xf32>
    %c0_3 = arith.constant 0 : index
    %c0_4 = arith.constant 0 : index
    %4 = vector.load %arg3[%c0_3, %c0_4] : memref<1x128xf32, #tpu.memory_space<vmem>>, vector<1x128xf32>
    %5 = vector.broadcast %4 : vector<1x128xf32> to vector<8x128xf32>
    %6 = arith.addf %3, %5 : vector<8x128xf32>
    %cst_5 = arith.constant 0.000000e+00 : f32
    %7 = vector.broadcast %cst_5 : f32 to vector<8x128xf32>
    %8 = arith.maximumf %6, %7 : vector<8x128xf32>
    %9 = arith.truncf %8 : vector<8x128xf32> to vector<8x128xbf16>
    %c0_6 = arith.constant 0 : index
    %c0_7 = arith.constant 0 : index
    %10 = vector.load %arg4[%c0_6, %c0_7] : memref<128x128xbf16, #tpu.memory_space<vmem>>, vector<128x128xbf16>
    %cst_8 = arith.constant dense<0.000000e+00> : vector<8x128xf32>
    %11 = tpu.matmul %9, %10, %cst_8 {dimension_numbers = #tpu.dot_dimension_numbers<[1], [0], [0], [1], [0, 0, 1, 1], [], []>} : vector<8x128xbf16>, vector<128x128xbf16>, vector<8x128xf32> -> vector<8x128xf32>
    %c0_9 = arith.constant 0 : index
    %c0_10 = arith.constant 0 : index
    %12 = vector.load %arg5[%c0_9, %c0_10] : memref<1x128xf32, #tpu.memory_space<vmem>>, vector<1x128xf32>
    %13 = vector.broadcast %12 : vector<1x128xf32> to vector<8x128xf32>
    %14 = arith.addf %11, %13 : vector<8x128xf32>
    %cst_11 = arith.constant 0.000000e+00 : f32
    %15 = vector.broadcast %cst_11 : f32 to vector<8x128xf32>
    %16 = arith.maximumf %14, %15 : vector<8x128xf32>
    %c0_12 = arith.constant 0 : index
    %c0_13 = arith.constant 0 : index
    %17 = vector.load %arg6[%c0_12, %c0_13] : memref<1x128xf32, #tpu.memory_space<vmem>>, vector<1x128xf32>
    %18 = vector.broadcast %17 : vector<1x128xf32> to vector<8x128xf32>
    %19 = arith.mulf %16, %18 : vector<8x128xf32>
    %cst_14 = arith.constant dense<0.000000e+00> : vector<8xf32>
    %20 = vector.multi_reduction <add>, %19, %cst_14 [1] : vector<8x128xf32> to vector<8xf32>
    %21 = vector.shape_cast %20 : vector<8xf32> to vector<8x1xf32>
    %c0_15 = arith.constant 0 : index
    %c0_16 = arith.constant 0 : index
    %22 = vector.load %arg7[%c0_15, %c0_16] : memref<1x1xf32, #tpu.memory_space<vmem>>, vector<1x1xf32>
    %23 = vector.broadcast %22 : vector<1x1xf32> to vector<8x1xf32>
    %24 = arith.addf %21, %23 : vector<8x1xf32>
    %c0_17 = arith.constant 0 : index
    %c0_18 = arith.constant 0 : index
    %25 = vector.load %arg8[%c0_17, %c0_18] : memref<8x1xf32, #tpu.memory_space<vmem>>, vector<8x1xf32>
    tpu.vector_store %arg8[%c0_17, %c0_18], %24 {strides = array<i32>} : memref<8x1xf32, #tpu.memory_space<vmem>>, vector<8x1xf32>,
    return
  }
  func.func @transform_0(%arg0: i32) -> (i32, i32) {
    %c0_i32 = arith.constant 0 : i32
    %c0_i32_0 = arith.constant 0 : i32
    return %arg0, %c0_i32 : i32, i32
  }
  func.func @transform_1(%arg0: i32) -> (i32, i32) {
    %c0_i32 = arith.constant 0 : i32
    %c0_i32_0 = arith.constant 0 : i32
    %c0_i32_1 = arith.constant 0 : i32
    return %c0_i32, %c0_i32_0 : i32, i32
  }
  func.func @transform_2(%arg0: i32) -> (i32, i32) {
    %c0_i32 = arith.constant 0 : i32
    %c0_i32_0 = arith.constant 0 : i32
    %c0_i32_1 = arith.constant 0 : i32
    return %c0_i32, %c0_i32_0 : i32, i32
  }
  func.func @transform_3(%arg0: i32) -> (i32, i32) {
    %c0_i32 = arith.constant 0 : i32
    %c0_i32_0 = arith.constant 0 : i32
    %c0_i32_1 = arith.constant 0 : i32
    return %c0_i32, %c0_i32_0 : i32, i32
  }
  func.func @transform_4(%arg0: i32) -> (i32, i32) {
    %c0_i32 = arith.constant 0 : i32
    %c0_i32_0 = arith.constant 0 : i32
    %c0_i32_1 = arith.constant 0 : i32
    return %c0_i32, %c0_i32_0 : i32, i32
  }
  func.func @transform_5(%arg0: i32) -> (i32, i32) {
    %c0_i32 = arith.constant 0 : i32
    %c0_i32_0 = arith.constant 0 : i32
    %c0_i32_1 = arith.constant 0 : i32
    return %c0_i32, %c0_i32_0 : i32, i32
  }
  func.func @transform_6(%arg0: i32) -> (i32, i32) {
    %c0_i32 = arith.constant 0 : i32
    %c0_i32_0 = arith.constant 0 : i32
    %c0_i32_1 = arith.constant 0 : i32
    return %c0_i32, %c0_i32_0 : i32, i32
  }
  func.func @transform_7(%arg0: i32) -> (i32, i32) {
    %c0_i32 = arith.constant 0 : i32
    %c0_i32_0 = arith.constant 0 : i32
    return %arg0, %c0_i32 : i32, i32
  }
}

</mosaic_0001>

<llo_original>
// kernel: tpu_custom_call.1
$region0: #{tpu_custom_call.1}
  #allocation0 [shape = 'u32[]', space=smem, size = 0x4, offset = 0x4, fixed_abs, tag = 'smem constant byte address 0x4 - core index']
  #allocation1 [shape = 'u32[144,128]{1,0:T(1,128)}', space=vmem, size = 0x12000, scoped, tag = 'internal scratch']
  #allocation2 [shape = 'f32[1,1]{1,0:T(1,128)S(1)}', space=vmem, size = 0x200, scoped, tag = 'scoped memory for tpu_custom_call.1']
  %s0 = inlined_call_operand.hbm [shape: f32[8,128], index: 0, kind: input, shape index: {}]
  %s1 = inlined_call_operand.hbm [shape: bf16[128,128], index: 1, kind: input, shape index: {}]
  %s2 = inlined_call_operand.vmem [shape: f32[1,128], index: 2, kind: input, shape index: {}]
  %s3 = inlined_call_operand.hbm [shape: bf16[128,128], index: 3, kind: input, shape index: {}]
  %s4 = inlined_call_operand.vmem [shape: f32[1,128], index: 4, kind: input, shape index: {}]
  %s5 = inlined_call_operand.vmem [shape: f32[1,128], index: 5, kind: input, shape index: {}]
  %s6 = inlined_call_operand.<no memory space> [shape: f32[1,1], index: 6, kind: input, shape index: {}]
  %s7 = inlined_call_operand.vmem [shape: f32[8,1], index: 7, kind: output, shape index: {}]
  %s8 = sld [smem:[#allocation0]]
  $region50: #{tpu_custom_call.1} parent=0
    _
  %s10 = ssub.s32 1, %s8
  %s11 = scalar_select 0, %s10, %s8
  %v12 = vstv %s6
  %13 = vst [vmem:[#allocation2] sm:$0x1] %v12
  $region1: #{tpu_custom_call.1} parent=0
    #allocation3 [shape = 'u8[4096]{0}', space=vmem, size = 0x1000, scoped, tag = 'input window, operand 0, single buffered']
    #allocation4 [shape = 's32[1]{0}', space=sflag, size = 0x4, scoped, tag = 'scoped memory for tpu_custom_call.1']
    #allocation5 [shape = 'u8[32768]{0}', space=vmem, size = 0x8000, scoped, tag = 'input window, operand 1, single buffered']
    #allocation6 [shape = 's32[1]{0}', space=sflag, size = 0x4, scoped, tag = 'scoped memory for tpu_custom_call.1']
    #allocation7 [shape = 'u8[32768]{0}', space=vmem, size = 0x8000, scoped, tag = 'input window, operand 3, single buffered']
    %14 = vsyncpa [#allocation4], 0
    %15 = vsyncpa [#allocation6], 0
    // Predicated region
    $region2: #{tpu_custom_call.1} parent=1 // pred_check
      _
    $region3: #{tpu_custom_call.1} parent=1 // pred_check_branch
      %17 = sbr.rel (0) target = $region5
    $region4: #{tpu_custom_call.1} parent=1 // pred_region
      %s19 = ssub.s32 128, 128
      %20 = vsyncadd [#allocation4], %s19
      %s22 = sshll.u32 [#allocation3], 4
      %s23 = int_to_ptr.vmem [resolvable:$true] %s22
      %25 = dma.hbm_to_vmem [thread:$0]  %s0, 128, %s23, [#allocation4]
    $region5: #{tpu_custom_call.1} parent=1 // pred_fallthru
      _
    // Predicated region
    $region6: #{tpu_custom_call.1} parent=1 // pred_check
      _
    $region7: #{tpu_custom_call.1} parent=1 // pred_check_branch
      %27 = sbr.rel (0) target = $region9
    $region8: #{tpu_custom_call.1} parent=1 // pred_region
      %s29 = ssub.s32 1024, 1024
      %30 = vsyncadd [#allocation6], %s29
      %s31 = sshll.u32 [#allocation5], 4
      %s32 = int_to_ptr.vmem [resolvable:$true] %s31
      %37 = dma.hbm_to_vmem [thread:$0]  %s1, 1024, %s32, [#allocation6], 64, 64, 4
    $region9: #{tpu_custom_call.1} parent=1 // pred_fallthru
      _
    // Predicated region
    $region10: #{tpu_custom_call.1} parent=1 // pred_check
      _
    $region11: #{tpu_custom_call.1} parent=1 // pred_check_branch
      %39 = sbr.rel (0) target = $region13
    $region12: #{tpu_custom_call.1} parent=1 // pred_region
      _
    $region13: #{tpu_custom_call.1} parent=1 // pred_fallthru
      _
    // Predicated region
    $region14: #{tpu_custom_call.1} parent=1 // pred_check
      _
    $region15: #{tpu_custom_call.1} parent=1 // pred_check_branch
      %41 = sbr.rel (0) target = $region17
    $region16: #{tpu_custom_call.1} parent=1 // pred_region
      %s43 = ssub.s32 1024, 1024
      %44 = vsyncadd [#allocation6], %s43
      %s45 = sshll.u32 [#allocation7], 4
      %s46 = int_to_ptr.vmem [resolvable:$true] %s45
      %51 = dma.hbm_to_vmem [thread:$0]  %s3, 1024, %s46, [#allocation6], 64, 64, 4
    $region17: #{tpu_custom_call.1} parent=1 // pred_fallthru
      _
    // Predicated region
    $region18: #{tpu_custom_call.1} parent=1 // pred_check
      _
    $region19: #{tpu_custom_call.1} parent=1 // pred_check_branch
      %53 = sbr.rel (0) target = $region21
    $region20: #{tpu_custom_call.1} parent=1 // pred_region
      _
    $region21: #{tpu_custom_call.1} parent=1 // pred_fallthru
      _
    // Predicated region
    $region22: #{tpu_custom_call.1} parent=1 // pred_check
      _
    $region23: #{tpu_custom_call.1} parent=1 // pred_check_branch
      %55 = sbr.rel (0) target = $region25
    $region24: #{tpu_custom_call.1} parent=1 // pred_region
      _
    $region25: #{tpu_custom_call.1} parent=1 // pred_fallthru
      _
    // Predicated region
    $region26: #{tpu_custom_call.1} parent=1 // pred_check
      _
    $region27: #{tpu_custom_call.1} parent=1 // pred_check_branch
      %57 = sbr.rel (0) target = $region29
    $region28: #{tpu_custom_call.1} parent=1 // pred_region
      _
    $region29: #{tpu_custom_call.1} parent=1 // pred_fallthru
      _
    // Predicated region
    $region30: #{tpu_custom_call.1} parent=1 // pred_check
      _
    $region31: #{tpu_custom_call.1} parent=1 // pred_check_branch
      %59 = sbr.rel (0) target = $region33
    $region32: #{tpu_custom_call.1} parent=1 // pred_region
      %60 = dma.done [#allocation4], 128
    $region33: #{tpu_custom_call.1} parent=1 // pred_fallthru
      _
    // Predicated region
    $region34: #{tpu_custom_call.1} parent=1 // pred_check
      _
    $region35: #{tpu_custom_call.1} parent=1 // pred_check_branch
      %62 = sbr.rel (0) target = $region37
    $region36: #{tpu_custom_call.1} parent=1 // pred_region
      %63 = dma.done [#allocation6], 1024
    $region37: #{tpu_custom_call.1} parent=1 // pred_fallthru
      _
    // Predicated region
    $region38: #{tpu_custom_call.1} parent=1 // pred_check
      _
    $region39: #{tpu_custom_call.1} parent=1 // pred_check_branch
      %65 = sbr.rel (0) target = $region41
    $region40: #{tpu_custom_call.1} parent=1 // pred_region
      %66 = dma.done [#allocation6], 1024
    $region41: #{tpu_custom_call.1} parent=1 // pred_fallthru
      _
    %v68 = vld [vmem:[#allocation3] sm:$0xff]
    %v69 = vpack.c.bf16 %v68, %v68
    %v70 = vld [vmem:[#allocation5] sm:$0xf]
    %v71 = vld [vmem:[#allocation5 + $0x4] sm:$0xf]
    %v72 = vld [vmem:[#allocation5 + $0x8] sm:$0xf]
    %v73 = vld [vmem:[#allocation5 + $0xc] sm:$0xf]
    %v74 = vld [vmem:[#allocation5 + $0x10] sm:$0xf]
    %v75 = vld [vmem:[#allocation5 + $0x14] sm:$0xf]
    %v76 = vld [vmem:[#allocation5 + $0x18] sm:$0xf]
    %v77 = vld [vmem:[#allocation5 + $0x1c] sm:$0xf]
    %v78 = vld [vmem:[#allocation5 + $0x20] sm:$0xf]
    %v79 = vld [vmem:[#allocation5 + $0x24] sm:$0xf]
    %v80 = vld [vmem:[#allocation5 + $0x28] sm:$0xf]
    %v81 = vld [vmem:[#allocation5 + $0x2c] sm:$0xf]
    %v82 = vld [vmem:[#allocation5 + $0x30] sm:$0xf]
    %v83 = vld [vmem:[#allocation5 + $0x34] sm:$0xf]
    %v84 = vld [vmem:[#allocation5 + $0x38] sm:$0xf]
    %v85 = vld [vmem:[#allocation5 + $0x3c] sm:$0xf]
    %v86 = vld [vmem:[%s2] sm:$0x1]
    %v88 = vlaneseq
    %v89 = vshrl.u32 %v88, 7
    %v90 = vsub.s32 0, %v89
    %v91 = vrot.slane %v86, %v90
    %v109 = vunpack.c.l.b16 %v70
    %v110 = vunpack.c.l.b16 %v71
    %v111 = vunpack.c.l.b16 %v72
    %v112 = vunpack.c.l.b16 %v73
    %v113 = vunpack.c.l.b16 %v74
    %v114 = vunpack.c.l.b16 %v75
    %v115 = vunpack.c.l.b16 %v76
    %v116 = vunpack.c.l.b16 %v77
    %v117 = vunpack.c.l.b16 %v78
    %v118 = vunpack.c.l.b16 %v79
    %v119 = vunpack.c.l.b16 %v80
    %v120 = vunpack.c.l.b16 %v81
    %v121 = vunpack.c.l.b16 %v82
    %v122 = vunpack.c.l.b16 %v83
    %v123 = vunpack.c.l.b16 %v84
    %v124 = vunpack.c.l.b16 %v85
    %v125 = vpack.c.b16 %v110, %v109
    %v126 = vpack.c.b16 %v112, %v111
    %v127 = vpack.c.b16 %v114, %v113
    %v128 = vpack.c.b16 %v116, %v115
    %v129 = vpack.c.b16 %v118, %v117
    %v130 = vpack.c.b16 %v120, %v119
    %v131 = vpack.c.b16 %v122, %v121
    %v132 = vpack.c.b16 %v124, %v123
    %141 = vmatprep.subr.bf16.mxu0 0
    %142 = vmatpush1.bf16.msra.mxu0 %v125
    %143 = vmatprep.subr.bf16.mxu0 0
    %144 = vmatpush1.bf16.msra.mxu0 %v126
    %145 = vmatprep.subr.bf16.mxu0 0
    %146 = vmatpush1.bf16.msra.mxu0 %v127
    %147 = vmatprep.subr.bf16.mxu0 0
    %148 = vmatpush1.bf16.msra.mxu0 %v128
    %149 = vmatprep.subr.bf16.mxu0 0
    %150 = vmatpush1.bf16.msra.mxu0 %v129
    %151 = vmatprep.subr.bf16.mxu0 0
    %152 = vmatpush1.bf16.msra.mxu0 %v130
    %153 = vmatprep.subr.bf16.mxu0 0
    %154 = vmatpush1.bf16.msra.mxu0 %v131
    %155 = vmatprep.subr.bf16.mxu0 0
    %156 = vmatpush1.bf16.msra.mxu0 %v132
    %157 = vmatprep.subr.bf16.mxu0 0
    %158 = vmatpush1.bf16.msra.mxu0 0
    %159 = vmatprep.subr.bf16.mxu0 0
    %160 = vmatpush1.bf16.msra.mxu0 0
    %161 = vmatprep.subr.bf16.mxu0 0
    %162 = vmatpush1.bf16.msra.mxu0 0
    %163 = vmatprep.subr.bf16.mxu0 0
    %164 = vmatpush1.bf16.msra.mxu0 0
    %165 = vmatprep.subr.bf16.mxu0 0
    %166 = vmatpush1.bf16.msra.mxu0 0
    %167 = vmatprep.subr.bf16.mxu0 0
    %168 = vmatpush1.bf16.msra.mxu0 0
    %169 = vmatprep.subr.bf16.mxu0 0
    %170 = vmatpush1.bf16.msra.mxu0 0
    %171 = vmatprep.subr.bf16.mxu0 0
    %172 = vmatpush1.bf16.msra.mxu0 0
    %173 = vmatprep.mubr.bf16.mxu0 0
    %174 = vmatmul.mubr.bf16.gmra.mrb[0].mxu0 %v69
    %v175 = vpop.f32.mrb[0].mxu0
    %v176 = vadd.f32 %v91, %v175
    %v177 = vpop.f32.mrb[0].mxu0
    %v178 = vpop.f32.mrb[0].mxu0
    %v179 = vpop.f32.mrb[0].mxu0
    %180 = vdwg.mxu0
    %v181 = vmax.f32 %v176, 0.0
    %v182 = vpack.c.bf16 %v181, %v181
    %v183 = vld [vmem:[#allocation7] sm:$0xf]
    %v184 = vld [vmem:[#allocation7 + $0x4] sm:$0xf]
    %v185 = vld [vmem:[#allocation7 + $0x8] sm:$0xf]
    %v186 = vld [vmem:[#allocation7 + $0xc] sm:$0xf]
    %v187 = vld [vmem:[#allocation7 + $0x10] sm:$0xf]
    %v188 = vld [vmem:[#allocation7 + $0x14] sm:$0xf]
    %v189 = vld [vmem:[#allocation7 + $0x18] sm:$0xf]
    %v190 = vld [vmem:[#allocation7 + $0x1c] sm:$0xf]
    %v191 = vld [vmem:[#allocation7 + $0x20] sm:$0xf]
    %v192 = vld [vmem:[#allocation7 + $0x24] sm:$0xf]
    %v193 = vld [vmem:[#allocation7 + $0x28] sm:$0xf]
    %v194 = vld [vmem:[#allocation7 + $0x2c] sm:$0xf]
    %v195 = vld [vmem:[#allocation7 + $0x30] sm:$0xf]
    %v196 = vld [vmem:[#allocation7 + $0x34] sm:$0xf]
    %v197 = vld [vmem:[#allocation7 + $0x38] sm:$0xf]
    %v198 = vld [vmem:[#allocation7 + $0x3c] sm:$0xf]
    %v199 = vld [vmem:[%s4] sm:$0x1]
    %v201 = vlaneseq
    %v202 = vshrl.u32 %v201, 7
    %v203 = vsub.s32 0, %v202
    %v204 = vrot.slane %v199, %v203
    %v222 = vunpack.c.l.b16 %v183
    %v223 = vunpack.c.l.b16 %v184
    %v224 = vunpack.c.l.b16 %v185
    %v225 = vunpack.c.l.b16 %v186
    %v226 = vunpack.c.l.b16 %v187
    %v227 = vunpack.c.l.b16 %v188
    %v228 = vunpack.c.l.b16 %v189
    %v229 = vunpack.c.l.b16 %v190
    %v230 = vunpack.c.l.b16 %v191
    %v231 = vunpack.c.l.b16 %v192
    %v232 = vunpack.c.l.b16 %v193
    %v233 = vunpack.c.l.b16 %v194
    %v234 = vunpack.c.l.b16 %v195
    %v235 = vunpack.c.l.b16 %v196
    %v236 = vunpack.c.l.b16 %v197
    %v237 = vunpack.c.l.b16 %v198
    %v238 = vpack.c.b16 %v223, %v222
    %v239 = vpack.c.b16 %v225, %v224
    %v240 = vpack.c.b16 %v227, %v226
    %v241 = vpack.c.b16 %v229, %v228
    %v242 = vpack.c.b16 %v231, %v230
    %v243 = vpack.c.b16 %v233, %v232
    %v244 = vpack.c.b16 %v235, %v234
    %v245 = vpack.c.b16 %v237, %v236
    %254 = vmatprep.subr.bf16.mxu0 0
    %255 = vmatpush1.bf16.msra.mxu0 %v238
    %256 = vmatprep.subr.bf16.mxu0 0
    %257 = vmatpush1.bf16.msra.mxu0 %v239
    %258 = vmatprep.subr.bf16.mxu0 0
    %259 = vmatpush1.bf16.msra.mxu0 %v240
    %260 = vmatprep.subr.bf16.mxu0 0
    %261 = vmatpush1.bf16.msra.mxu0 %v241
    %262 = vmatprep.subr.bf16.mxu0 0
    %263 = vmatpush1.bf16.msra.mxu0 %v242
    %264 = vmatprep.subr.bf16.mxu0 0
    %265 = vmatpush1.bf16.msra.mxu0 %v243
    %266 = vmatprep.subr.bf16.mxu0 0
    %267 = vmatpush1.bf16.msra.mxu0 %v244
    %268 = vmatprep.subr.bf16.mxu0 0
    %269 = vmatpush1.bf16.msra.mxu0 %v245
    %270 = vmatprep.subr.bf16.mxu0 0
    %271 = vmatpush1.bf16.msra.mxu0 0
    %272 = vmatprep.subr.bf16.mxu0 0
    %273 = vmatpush1.bf16.msra.mxu0 0
    %274 = vmatprep.subr.bf16.mxu0 0
    %275 = vmatpush1.bf16.msra.mxu0 0
    %276 = vmatprep.subr.bf16.mxu0 0
    %277 = vmatpush1.bf16.msra.mxu0 0
    %278 = vmatprep.subr.bf16.mxu0 0
    %279 = vmatpush1.bf16.msra.mxu0 0
    %280 = vmatprep.subr.bf16.mxu0 0
    %281 = vmatpush1.bf16.msra.mxu0 0
    %282 = vmatprep.subr.bf16.mxu0 0
    %283 = vmatpush1.bf16.msra.mxu0 0
    %284 = vmatprep.subr.bf16.mxu0 0
    %285 = vmatpush1.bf16.msra.mxu0 0
    %286 = vmatprep.mubr.bf16.mxu0 0
    %287 = vmatmul.mubr.bf16.gmra.mrb[0].mxu0 %v182
    %v288 = vpop.f32.mrb[0].mxu0
    %v289 = vadd.f32 %v204, %v288
    %v290 = vpop.f32.mrb[0].mxu0
    %v291 = vpop.f32.mrb[0].mxu0
    %v292 = vpop.f32.mrb[0].mxu0
    %293 = vdwg.mxu0
    %v294 = vmax.f32 %v289, 0.0
    %v295 = vld [vmem:[%s5] sm:$0x1]
    %v297 = vlaneseq
    %v298 = vshrl.u32 %v297, 7
    %v299 = vsub.s32 0, %v298
    %v300 = vrot.slane %v295, %v299
    %v302 = vmul.f32 %v294, %v300
    %303 = vadd.xlane.f32.xlu0 %v302
    %v304 = vpop.xlane.xlu0 %303
    %v305 = vld [vmem:[#allocation2] sm:$0x1]
    %v307 = vlaneseq
    %v308 = vshrl.u32 %v307, 7
    %v309 = vsub.s32 0, %v308
    %v310 = vrot.slane %v305, %v309
    %v312 = vadd.f32 %v304, %v310
    %vm313 = vcmask 7168
    %314 = vst.msk [vmem:[%s7] sm:$0xff] %vm313, %v312
    // Predicated region
    $region42: #{tpu_custom_call.1} parent=1 // pred_check
      _
    $region43: #{tpu_custom_call.1} parent=1 // pred_check_branch
      %316 = sbr.rel (0) target = $region45
    $region44: #{tpu_custom_call.1} parent=1 // pred_region
      _
    $region45: #{tpu_custom_call.1} parent=1 // pred_fallthru
      _
    // Predicated region
    $region46: #{tpu_custom_call.1} parent=1 // pred_check
      _
    $region47: #{tpu_custom_call.1} parent=1 // pred_check_branch
      %318 = sbr.rel (0) target = $region49
    $region48: #{tpu_custom_call.1} parent=1 // pred_region
      _
    $region49: #{tpu_custom_call.1} parent=1 // pred_fallthru
      _
    %319 = vsyncpa [#allocation4], 1
    %320 = vsyncpa [#allocation6], 1

// kernel: tpu_custom_call.1
$region0: #{tpu_custom_call.1}
  #allocation0 [shape = 'u32[]', space=smem, size = 0x4, offset = 0x4, fixed_abs, tag = 'smem constant byte address 0x4 - core index']
  #allocation1 [shape = 'u32[144,128]{1,0:T(1,128)}', space=vmem, size = 0x12000, scoped, tag = 'internal scratch']
  #allocation2 [shape = 'f32[1,1]{1,0:T(1,128)S(1)}', space=vmem, size = 0x200, scoped, tag = 'scoped memory for tpu_custom_call.1']
  %s0 = inlined_call_operand.hbm [shape: f32[8,128], index: 0, kind: input, shape index: {}]
  %s1 = inlined_call_operand.hbm [shape: bf16[128,128], index: 1, kind: input, shape index: {}]
  %s2 = inlined_call_operand.vmem [shape: f32[1,128], index: 2, kind: input, shape index: {}]
  %s3 = inlined_call_operand.hbm [shape: bf16[128,128], index: 3, kind: input, shape index: {}]
  %s4 = inlined_call_operand.vmem [shape: f32[1,128], index: 4, kind: input, shape index: {}]
  %s5 = inlined_call_operand.vmem [shape: f32[1,128], index: 5, kind: input, shape index: {}]
  %s6 = inlined_call_operand.<no memory space> [shape: f32[1,1], index: 6, kind: input, shape index: {}]
  %s7 = inlined_call_operand.vmem [shape: f32[8,1], index: 7, kind: output, shape index: {}]
  %s8 = sld [smem:[#allocation0]]
  $region50: #{tpu_custom_call.1} parent=0
    _
  %s10 = ssub.s32 1, %s8
  %s11 = scalar_select 0, %s10, %s8
  %v12 = vstv %s6
  %13 = vst [vmem:[#allocation2] sm:$0x1] %v12
  $region1: #{tpu_custom_call.1} parent=0
    #allocation3 [shape = 'u8[4096]{0}', space=vmem, size = 0x1000, scoped, tag = 'input window, operand 0, single buffered']
    #allocation4 [shape = 's32[1]{0}', space=sflag, size = 0x4, scoped, tag = 'scoped memory for tpu_custom_call.1']
    #allocation5 [shape = 'u8[32768]{0}', space=vmem, size = 0x8000, scoped, tag = 'input window, operand 1, single buffered']
    #allocation6 [shape = 's32[1]{0}', space=sflag, size = 0x4, scoped, tag = 'scoped memory for tpu_custom_call.1']
    #allocation7 [shape = 'u8[32768]{0}', space=vmem, size = 0x8000, scoped, tag = 'input window, operand 3, single buffered']
    %14 = vsyncpa [#allocation4], 0
    %15 = vsyncpa [#allocation6], 0
    // Predicated region
    $region2: #{tpu_custom_call.1} parent=1 // pred_check
      _
    $region3: #{tpu_custom_call.1} parent=1 // pred_check_branch
      %17 = sbr.rel (0) target = $region5
    $region4: #{tpu_custom_call.1} parent=1 // pred_region
      %s19 = ssub.s32 128, 128
      %20 = vsyncadd [#allocation4], %s19
      %s22 = sshll.u32 [#allocation3], 4
      %s23 = int_to_ptr.vmem [resolvable:$true] %s22
      %25 = dma.hbm_to_vmem [thread:$0]  %s0, 128, %s23, [#allocation4]
    $region5: #{tpu_custom_call.1} parent=1 // pred_fallthru
      _
    // Predicated region
    $region6: #{tpu_custom_call.1} parent=1 // pred_check
      _
    $region7: #{tpu_custom_call.1} parent=1 // pred_check_branch
      %27 = sbr.rel (0) target = $region9
    $region8: #{tpu_custom_call.1} parent=1 // pred_region
      %s29 = ssub.s32 1024, 1024
      %30 = vsyncadd [#allocation6], %s29
      %s31 = sshll.u32 [#allocation5], 4
      %s32 = int_to_ptr.vmem [resolvable:$true] %s31
      %37 = dma.hbm_to_vmem [thread:$0]  %s1, 1024, %s32, [#allocation6], 64, 64, 4
    $region9: #{tpu_custom_call.1} parent=1 // pred_fallthru
      _
    // Predicated region
    $region10: #{tpu_custom_call.1} parent=1 // pred_check
      _
    $region11: #{tpu_custom_call.1} parent=1 // pred_check_branch
      %39 = sbr.rel (0) target = $region13
    $region12: #{tpu_custom_call.1} parent=1 // pred_region
      _
    $region13: #{tpu_custom_call.1} parent=1 // pred_fallthru
      _
    // Predicated region
    $region14: #{tpu_custom_call.1} parent=1 // pred_check
      _
    $region15: #{tpu_custom_call.1} parent=1 // pred_check_branch
      %41 = sbr.rel (0) target = $region17
    $region16: #{tpu_custom_call.1} parent=1 // pred_region
      %s43 = ssub.s32 1024, 1024
      %44 = vsyncadd [#allocation6], %s43
      %s45 = sshll.u32 [#allocation7], 4
      %s46 = int_to_ptr.vmem [resolvable:$true] %s45
      %51 = dma.hbm_to_vmem [thread:$0]  %s3, 1024, %s46, [#allocation6], 64, 64, 4
    $region17: #{tpu_custom_call.1} parent=1 // pred_fallthru
      _
    // Predicated region
    $region18: #{tpu_custom_call.1} parent=1 // pred_check
      _
    $region19: #{tpu_custom_call.1} parent=1 // pred_check_branch
      %53 = sbr.rel (0) target = $region21
    $region20: #{tpu_custom_call.1} parent=1 // pred_region
      _
    $region21: #{tpu_custom_call.1} parent=1 // pred_fallthru
      _
    // Predicated region
    $region22: #{tpu_custom_call.1} parent=1 // pred_check
      _
    $region23: #{tpu_custom_call.1} parent=1 // pred_check_branch
      %55 = sbr.rel (0) target = $region25
    $region24: #{tpu_custom_call.1} parent=1 // pred_region
      _
    $region25: #{tpu_custom_call.1} parent=1 // pred_fallthru
      _
    // Predicated region
    $region26: #{tpu_custom_call.1} parent=1 // pred_check
      _
    $region27: #{tpu_custom_call.1} parent=1 // pred_check_branch
      %57 = sbr.rel (0) target = $region29
    $region28: #{tpu_custom_call.1} parent=1 // pred_region
      _
    $region29: #{tpu_custom_call.1} parent=1 // pred_fallthru
      _
    // Predicated region
    $region30: #{tpu_custom_call.1} parent=1 // pred_check
      _
    $region31: #{tpu_custom_call.1} parent=1 // pred_check_branch
      %59 = sbr.rel (0) target = $region33
    $region32: #{tpu_custom_call.1} parent=1 // pred_region
      %60 = dma.done [#allocation4], 128
    $region33: #{tpu_custom_call.1} parent=1 // pred_fallthru
      _
    // Predicated region
    $region34: #{tpu_custom_call.1} parent=1 // pred_check
      _
    $region35: #{tpu_custom_call.1} parent=1 // pred_check_branch
      %62 = sbr.rel (0) target = $region37
    $region36: #{tpu_custom_call.1} parent=1 // pred_region
      %63 = dma.done [#allocation6], 1024
    $region37: #{tpu_custom_call.1} parent=1 // pred_fallthru
      _
    // Predicated region
    $region38: #{tpu_custom_call.1} parent=1 // pred_check
      _
    $region39: #{tpu_custom_call.1} parent=1 // pred_check_branch
      %65 = sbr.rel (0) target = $region41
    $region40: #{tpu_custom_call.1} parent=1 // pred_region
      %66 = dma.done [#allocation6], 1024
    $region41: #{tpu_custom_call.1} parent=1 // pred_fallthru
      _
    %v68 = vld [vmem:[#allocation3] sm:$0xff]
    %v69 = vpack.c.bf16 %v68, %v68
    %v70 = vld [vmem:[#allocation5] sm:$0xf]
    %v71 = vld [vmem:[#allocation5 + $0x4] sm:$0xf]
    %v72 = vld [vmem:[#allocation5 + $0x8] sm:$0xf]
    %v73 = vld [vmem:[#allocation5 + $0xc] sm:$0xf]
    %v74 = vld [vmem:[#allocation5 + $0x10] sm:$0xf]
    %v75 = vld [vmem:[#allocation5 + $0x14] sm:$0xf]
    %v76 = vld [vmem:[#allocation5 + $0x18] sm:$0xf]
    %v77 = vld [vmem:[#allocation5 + $0x1c] sm:$0xf]
    %v78 = vld [vmem:[#allocation5 + $0x20] sm:$0xf]
    %v79 = vld [vmem:[#allocation5 + $0x24] sm:$0xf]
    %v80 = vld [vmem:[#allocation5 + $0x28] sm:$0xf]
    %v81 = vld [vmem:[#allocation5 + $0x2c] sm:$0xf]
    %v82 = vld [vmem:[#allocation5 + $0x30] sm:$0xf]
    %v83 = vld [vmem:[#allocation5 + $0x34] sm:$0xf]
    %v84 = vld [vmem:[#allocation5 + $0x38] sm:$0xf]
    %v85 = vld [vmem:[#allocation5 + $0x3c] sm:$0xf]
    %v86 = vld [vmem:[%s2] sm:$0x1]
    %v88 = vlaneseq
    %v89 = vshrl.u32 %v88, 7
    %v90 = vsub.s32 0, %v89
    %v91 = vrot.slane %v86, %v90
    %v109 = vunpack.c.l.b16 %v70
    %v110 = vunpack.c.l.b16 %v71
    %v111 = vunpack.c.l.b16 %v72
    %v112 = vunpack.c.l.b16 %v73
    %v113 = vunpack.c.l.b16 %v74
    %v114 = vunpack.c.l.b16 %v75
    %v115 = vunpack.c.l.b16 %v76
    %v116 = vunpack.c.l.b16 %v77
    %v117 = vunpack.c.l.b16 %v78
    %v118 = vunpack.c.l.b16 %v79
    %v119 = vunpack.c.l.b16 %v80
    %v120 = vunpack.c.l.b16 %v81
    %v121 = vunpack.c.l.b16 %v82
    %v122 = vunpack.c.l.b16 %v83
    %v123 = vunpack.c.l.b16 %v84
    %v124 = vunpack.c.l.b16 %v85
    %v125 = vpack.c.b16 %v110, %v109
    %v126 = vpack.c.b16 %v112, %v111
    %v127 = vpack.c.b16 %v114, %v113
    %v128 = vpack.c.b16 %v116, %v115
    %v129 = vpack.c.b16 %v118, %v117
    %v130 = vpack.c.b16 %v120, %v119
    %v131 = vpack.c.b16 %v122, %v121
    %v132 = vpack.c.b16 %v124, %v123
    %141 = vmatprep.subr.bf16.mxu0 0
    %142 = vmatpush1.bf16.msra.mxu0 %v125
    %143 = vmatprep.subr.bf16.mxu0 0
    %144 = vmatpush1.bf16.msra.mxu0 %v126
    %145 = vmatprep.subr.bf16.mxu0 0
    %146 = vmatpush1.bf16.msra.mxu0 %v127
    %147 = vmatprep.subr.bf16.mxu0 0
    %148 = vmatpush1.bf16.msra.mxu0 %v128
    %149 = vmatprep.subr.bf16.mxu0 0
    %150 = vmatpush1.bf16.msra.mxu0 %v129
    %151 = vmatprep.subr.bf16.mxu0 0
    %152 = vmatpush1.bf16.msra.mxu0 %v130
    %153 = vmatprep.subr.bf16.mxu0 0
    %154 = vmatpush1.bf16.msra.mxu0 %v131
    %155 = vmatprep.subr.bf16.mxu0 0
    %156 = vmatpush1.bf16.msra.mxu0 %v132
    %157 = vmatprep.subr.bf16.mxu0 0
    %158 = vmatpush1.bf16.msra.mxu0 0
    %159 = vmatprep.subr.bf16.mxu0 0
    %160 = vmatpush1.bf16.msra.mxu0 0
    %161 = vmatprep.subr.bf16.mxu0 0
    %162 = vmatpush1.bf16.msra.mxu0 0
    %163 = vmatprep.subr.bf16.mxu0 0
    %164 = vmatpush1.bf16.msra.mxu0 0
    %165 = vmatprep.subr.bf16.mxu0 0
    %166 = vmatpush1.bf16.msra.mxu0 0
    %167 = vmatprep.subr.bf16.mxu0 0
    %168 = vmatpush1.bf16.msra.mxu0 0
    %169 = vmatprep.subr.bf16.mxu0 0
    %170 = vmatpush1.bf16.msra.mxu0 0
    %171 = vmatprep.subr.bf16.mxu0 0
    %172 = vmatpush1.bf16.msra.mxu0 0
    %173 = vmatprep.mubr.bf16.mxu0 0
    %174 = vmatmul.mubr.bf16.gmra.mrb[0].mxu0 %v69
    %v175 = vpop.f32.mrb[0].mxu0
    %v176 = vadd.f32 %v91, %v175
    %v177 = vpop.f32.mrb[0].mxu0
    %v178 = vpop.f32.mrb[0].mxu0
    %v179 = vpop.f32.mrb[0].mxu0
    %180 = vdwg.mxu0
    %v181 = vmax.f32 %v176, 0.0
    %v182 = vpack.c.bf16 %v181, %v181
    %v183 = vld [vmem:[#allocation7] sm:$0xf]
    %v184 = vld [vmem:[#allocation7 + $0x4] sm:$0xf]
    %v185 = vld [vmem:[#allocation7 + $0x8] sm:$0xf]
    %v186 = vld [vmem:[#allocation7 + $0xc] sm:$0xf]
    %v187 = vld [vmem:[#allocation7 + $0x10] sm:$0xf]
    %v188 = vld [vmem:[#allocation7 + $0x14] sm:$0xf]
    %v189 = vld [vmem:[#allocation7 + $0x18] sm:$0xf]
    %v190 = vld [vmem:[#allocation7 + $0x1c] sm:$0xf]
    %v191 = vld [vmem:[#allocation7 + $0x20] sm:$0xf]
    %v192 = vld [vmem:[#allocation7 + $0x24] sm:$0xf]
    %v193 = vld [vmem:[#allocation7 + $0x28] sm:$0xf]
    %v194 = vld [vmem:[#allocation7 + $0x2c] sm:$0xf]
    %v195 = vld [vmem:[#allocation7 + $0x30] sm:$0xf]
    %v196 = vld [vmem:[#allocation7 + $0x34] sm:$0xf]
    %v197 = vld [vmem:[#allocation7 + $0x38] sm:$0xf]
    %v198 = vld [vmem:[#allocation7 + $0x3c] sm:$0xf]
    %v199 = vld [vmem:[%s4] sm:$0x1]
    %v201 = vlaneseq
    %v202 = vshrl.u32 %v201, 7
    %v203 = vsub.s32 0, %v202
    %v204 = vrot.slane %v199, %v203
    %v222 = vunpack.c.l.b16 %v183
    %v223 = vunpack.c.l.b16 %v184
    %v224 = vunpack.c.l.b16 %v185
    %v225 = vunpack.c.l.b16 %v186
    %v226 = vunpack.c.l.b16 %v187
    %v227 = vunpack.c.l.b16 %v188
    %v228 = vunpack.c.l.b16 %v189
    %v229 = vunpack.c.l.b16 %v190
    %v230 = vunpack.c.l.b16 %v191
    %v231 = vunpack.c.l.b16 %v192
    %v232 = vunpack.c.l.b16 %v193
    %v233 = vunpack.c.l.b16 %v194
    %v234 = vunpack.c.l.b16 %v195
    %v235 = vunpack.c.l.b16 %v196
    %v236 = vunpack.c.l.b16 %v197
    %v237 = vunpack.c.l.b16 %v198
    %v238 = vpack.c.b16 %v223, %v222
    %v239 = vpack.c.b16 %v225, %v224
    %v240 = vpack.c.b16 %v227, %v226
    %v241 = vpack.c.b16 %v229, %v228
    %v242 = vpack.c.b16 %v231, %v230
    %v243 = vpack.c.b16 %v233, %v232
    %v244 = vpack.c.b16 %v235, %v234
    %v245 = vpack.c.b16 %v237, %v236
    %254 = vmatprep.subr.bf16.mxu0 0
    %255 = vmatpush1.bf16.msra.mxu0 %v238
    %256 = vmatprep.subr.bf16.mxu0 0
    %257 = vmatpush1.bf16.msra.mxu0 %v239
    %258 = vmatprep.subr.bf16.mxu0 0
    %259 = vmatpush1.bf16.msra.mxu0 %v240
    %260 = vmatprep.subr.bf16.mxu0 0
    %261 = vmatpush1.bf16.msra.mxu0 %v241
    %262 = vmatprep.subr.bf16.mxu0 0
    %263 = vmatpush1.bf16.msra.mxu0 %v242
    %264 = vmatprep.subr.bf16.mxu0 0
    %265 = vmatpush1.bf16.msra.mxu0 %v243
    %266 = vmatprep.subr.bf16.mxu0 0
    %267 = vmatpush1.bf16.msra.mxu0 %v244
    %268 = vmatprep.subr.bf16.mxu0 0
    %269 = vmatpush1.bf16.msra.mxu0 %v245
    %270 = vmatprep.subr.bf16.mxu0 0
    %271 = vmatpush1.bf16.msra.mxu0 0
    %272 = vmatprep.subr.bf16.mxu0 0
    %273 = vmatpush1.bf16.msra.mxu0 0
    %274 = vmatprep.subr.bf16.mxu0 0
    %275 = vmatpush1.bf16.msra.mxu0 0
    %276 = vmatprep.subr.bf16.mxu0 0
    %277 = vmatpush1.bf16.msra.mxu0 0
    %278 = vmatprep.subr.bf16.mxu0 0
    %279 = vmatpush1.bf16.msra.mxu0 0
    %280 = vmatprep.subr.bf16.mxu0 0
    %281 = vmatpush1.bf16.msra.mxu0 0
    %282 = vmatprep.subr.bf16.mxu0 0
    %283 = vmatpush1.bf16.msra.mxu0 0
    %284 = vmatprep.subr.bf16.mxu0 0
    %285 = vmatpush1.bf16.msra.mxu0 0
    %286 = vmatprep.mubr.bf16.mxu0 0
    %287 = vmatmul.mubr.bf16.gmra.mrb[0].mxu0 %v182
    %v288 = vpop.f32.mrb[0].mxu0
    %v289 = vadd.f32 %v204, %v288
    %v290 = vpop.f32.mrb[0].mxu0
    %v291 = vpop.f32.mrb[0].mxu0
    %v292 = vpop.f32.mrb[0].mxu0
    %293 = vdwg.mxu0
    %v294 = vmax.f32 %v289, 0.0
    %v295 = vld [vmem:[%s5] sm:$0x1]
    %v297 = vlaneseq
    %v298 = vshrl.u32 %v297, 7
    %v299 = vsub.s32 0, %v298
    %v300 = vrot.slane %v295, %v299
    %v302 = vmul.f32 %v294, %v300
    %303 = vadd.xlane.f32.xlu0 %v302
    %v304 = vpop.xlane.xlu0 %303
    %v305 = vld [vmem:[#allocation2] sm:$0x1]
    %v307 = vlaneseq
    %v308 = vshrl.u32 %v307, 7
    %v309 = vsub.s32 0, %v308
    %v310 = vrot.slane %v305, %v309
    %v312 = vadd.f32 %v304, %v310
    %vm313 = vcmask 7168
    %314 = vst.msk [vmem:[%s7] sm:$0xff] %vm313, %v312
    // Predicated region
    $region42: #{tpu_custom_call.1} parent=1 // pred_check
      _
    $region43: #{tpu_custom_call.1} parent=1 // pred_check_branch
      %316 = sbr.rel (0) target = $region45
    $region44: #{tpu_custom_call.1} parent=1 // pred_region
      _
    $region45: #{tpu_custom_call.1} parent=1 // pred_fallthru
      _
    // Predicated region
    $region46: #{tpu_custom_call.1} parent=1 // pred_check
      _
    $region47: #{tpu_custom_call.1} parent=1 // pred_check_branch
      %318 = sbr.rel (0) target = $region49
    $region48: #{tpu_custom_call.1} parent=1 // pred_region
      _
    $region49: #{tpu_custom_call.1} parent=1 // pred_fallthru
      _
    %319 = vsyncpa [#allocation4], 1
    %320 = vsyncpa [#allocation6], 1

</llo_original>
